<compile_context>
chip_gen: v7x
topology: tpu7x:2x2x1
jax: 0.10.0
libtpu: 0.0.40
codegen_flags: <defaults>
</compile_context>

<pallas_src>
import functools

import jax
import jax.numpy as jnp
import numpy as np
from jax import lax
from jax.experimental import pallas as pl
from jax.experimental.pallas import tpu as pltpu


# ------------------------------ Pallas kernel --------------------------------


def _superpixel_fused_kernel(x_ref, w_ref, b_ref, o_ref):
    """Fused PixelShuffle(2) + Conv2d(kernel=2, stride=2, Cout=1).

    x_ref: (1, C, T)  VMEM  -- one image tile: all C input channels, T pixels
    w_ref: (C, 1)     VMEM  -- conv weight flattened over (c, kh, kw)
    b_ref: (1, 1)     SMEM  -- conv bias (scalar)
    o_ref: (1, 1, T)  VMEM  -- lane-dense output slab
    """
    x = x_ref[0]                                    # (C, T)
    w = w_ref[...]                                  # (C, 1) broadcasts over lanes
    acc = jnp.sum(x * w, axis=0, keepdims=True)     # (1, T)  cross-sublane reduce
    o_ref[0] = acc + b_ref[0, 0]                    # scalar bias from SMEM


def _pick_hw_tile(hw, cap=8192):
    """Largest 128-multiple divisor of hw that is <= cap (else full hw)."""
    if hw <= cap or hw % 128 != 0:
        return hw
    t = cap - cap % 128
    while t >= 128:
        if hw % t == 0:
            return t
        t -= 128
    return hw


# ------------------------------- op wrapper ----------------------------------


@functools.partial(jax.jit, static_argnames=("factor",))
def super_pixels_forward(x_nchw, weight, bias, *, factor=2):
    """x: (N, inplanes, H, W) f32; weight: (1, planes, 2, 2); bias: (1,).

    Returns (N, 1, H, W), identical to
    Conv2d(planes, 1, k=2, s=2)(PixelShuffle(factor)(x)).
    """
    # The module's channel arithmetic only composes when factor == 2.
    assert factor == 2, "super_pixels is only well-formed for factor == 2"
    n, c, h, w = x_nchw.shape
    planes = c // (factor * 2)
    assert planes * factor * factor == c
    assert weight.shape == (1, planes, factor, factor)

    hw = h * w
    tile = _pick_hw_tile(hw)
    assert hw % tile == 0

    x3 = x_nchw.reshape(n, c, hw).astype(jnp.float32)      # free reshape (NCHW)
    w_flat = weight.reshape(c, 1).astype(jnp.float32)       # (c, kh, kw) flatten
    b_smem = bias.reshape(1, 1).astype(jnp.float32)

    out = pl.pallas_call(
        _superpixel_fused_kernel,
        out_shape=jax.ShapeDtypeStruct((n, 1, hw), jnp.float32),
        grid=(n, hw // tile),
        in_specs=[
            pl.BlockSpec((1, c, tile), lambda i, j: (i, 0, j)),
            pl.BlockSpec((c, 1), lambda i, j: (0, 0)),
            pl.BlockSpec(memory_space=pltpu.MemorySpace.SMEM),
        ],
        out_specs=pl.BlockSpec((1, 1, tile), lambda i, j: (i, 0, j)),
        compiler_params=pltpu.CompilerParams(
            dimension_semantics=("parallel", "parallel")),
    )(x3, w_flat, b_smem)
    return out.reshape(n, 1, h, w)


# --------------------------- pure-JAX reference -------------------------------


def _pixel_shuffle_nchw(x, r):
    n, c, h, w = x.shape
    oc = c // (r * r)
    x = x.reshape(n, oc, r, r, h, w)
    x = jnp.transpose(x, (0, 1, 4, 2, 5, 3))       # n, oc, h, r, w, r
    return x.reshape(n, oc, h * r, w * r)


def reference_forward(x_nchw, weight, bias, factor=2):
    xs = _pixel_shuffle_nchw(x_nchw, factor)
    y = lax.conv_general_dilated(
        xs, weight, window_strides=(factor, factor), padding="VALID",
        dimension_numbers=("NCHW", "OIHW", "NCHW"),
        precision=lax.Precision.HIGHEST)
    return y + bias.reshape(1, -1, 1, 1)


# ------------------------------------ main ------------------------------------


if __name__ == "__main__":
    key = jax.random.PRNGKey(0)
    kx, kw, kb = jax.random.split(key, 3)

    # Small shapes consistent with the module: inplanes must be divisible by 4.
    N, INPLANES, H, W = 2, 16, 16, 16
    FACTOR = 2
    planes = INPLANES // (FACTOR * 2)

    x = jax.random.normal(kx, (N, INPLANES, H, W), jnp.float32)
    bound = 1.0 / np.sqrt(planes * FACTOR * FACTOR)    # PyTorch Conv2d init bound
    weight = jax.random.uniform(kw, (1, planes, FACTOR, FACTOR), jnp.float32,
                                minval=-bound, maxval=bound)
    bias = jax.random.uniform(kb, (1,), jnp.float32, minval=-bound, maxval=bound)

    out = super_pixels_forward(x, weight, bias, factor=FACTOR)
    jax.block_until_ready(out)

    # Correctness vs explicit PixelShuffle + strided conv (all-f32 -> tight tol).
    ref = reference_forward(x, weight, bias, FACTOR)
    np.testing.assert_allclose(np.asarray(out), np.asarray(ref),
                               rtol=1e-5, atol=1e-5)
    assert out.shape == (N, 1, H, W)
    print("KERNEL_OK")
</pallas_src>

<mosaic_0001>
module attributes {stable_mosaic.version = 11 : i64} {
  func.func @_superpixel_fused_kernel(%arg0: i32, %arg1: i32, %arg2: memref<1x16x256xf32, #tpu.memory_space<vmem>>, %arg3: memref<16x1xf32, #tpu.memory_space<vmem>>, %arg4: memref<1x1xf32, #tpu.memory_space<smem>>, %arg5: memref<1x1x256xf32, #tpu.memory_space<vmem>>) attributes {dimension_semantics = [#tpu.dimension_semantics<parallel>, #tpu.dimension_semantics<parallel>], iteration_bounds = array<i64: 2, 1>, scalar_prefetch = 0 : i64, scratch_operands = 0 : i64, tpu.core_type = #tpu.core_type<tc>, window_params = [{transform_indices = @transform_0, window_bounds = array<i64: 1, 16, 256>}, {pipeline_mode = #tpu.pipeline_mode<synchronous>, transform_indices = @transform_1, window_bounds = array<i64: 16, 1>}, {transform_indices = @transform_2, window_bounds = array<i64: 1, 1>}, {transform_indices = @transform_3, window_bounds = array<i64: 1, 1, 256>}]} {
    %c0 = arith.constant 0 : index
    %c0_0 = arith.constant 0 : index
    %c0_1 = arith.constant 0 : index
    %0 = vector.load %arg2[%c0, %c0_0, %c0_1] : memref<1x16x256xf32, #tpu.memory_space<vmem>>, vector<1x16x256xf32>
    %1 = vector.shape_cast %0 : vector<1x16x256xf32> to vector<16x256xf32>
    %c0_2 = arith.constant 0 : index
    %c0_3 = arith.constant 0 : index
    %2 = vector.load %arg3[%c0_2, %c0_3] : memref<16x1xf32, #tpu.memory_space<vmem>>, vector<16x1xf32>
    %3 = vector.broadcast %2 : vector<16x1xf32> to vector<16x256xf32>
    %4 = arith.mulf %1, %3 : vector<16x256xf32>
    %cst = arith.constant dense<0.000000e+00> : vector<256xf32>
    %5 = vector.multi_reduction <add>, %4, %cst [0] : vector<16x256xf32> to vector<256xf32>
    %6 = vector.shape_cast %5 : vector<256xf32> to vector<1x256xf32>
    %c0_4 = arith.constant 0 : index
    %c0_5 = arith.constant 0 : index
    %7 = memref.load %arg4[%c0_4, %c0_5] : memref<1x1xf32, #tpu.memory_space<smem>>
    %8 = vector.broadcast %7 : f32 to vector<1x256xf32>
    %9 = arith.addf %6, %8 : vector<1x256xf32>
    %c0_6 = arith.constant 0 : index
    %c0_7 = arith.constant 0 : index
    %c0_8 = arith.constant 0 : index
    %10 = vector.load %arg5[%c0_6, %c0_7, %c0_8] : memref<1x1x256xf32, #tpu.memory_space<vmem>>, vector<1x1x256xf32>
    %11 = vector.shape_cast %10 : vector<1x1x256xf32> to vector<1x256xf32>
    %12 = vector.shape_cast %9 : vector<1x256xf32> to vector<1x1x256xf32>
    tpu.vector_store %arg5[%c0_6, %c0_7, %c0_8], %12 {strides = array<i32>} : memref<1x1x256xf32, #tpu.memory_space<vmem>>, vector<1x1x256xf32>,
    return
  }
  func.func @transform_0(%arg0: i32, %arg1: i32) -> (i32, i32, i32) {
    %c0_i32 = arith.constant 0 : i32
    %c0_i32_0 = arith.constant 0 : i32
    return %arg0, %c0_i32, %arg1 : i32, i32, i32
  }
  func.func @transform_1(%arg0: i32, %arg1: i32) -> (i32, i32) {
    %c0_i32 = arith.constant 0 : i32
    %c0_i32_0 = arith.constant 0 : i32
    %c0_i32_1 = arith.constant 0 : i32
    return %c0_i32, %c0_i32_0 : i32, i32
  }
  func.func @transform_2(%arg0: i32, %arg1: i32) -> (i32, i32) {
    %c0_i32 = arith.constant 0 : i32
    %c0_i32_0 = arith.constant 0 : i32
    %c0_i32_1 = arith.constant 0 : i32
    return %c0_i32, %c0_i32_0 : i32, i32
  }
  func.func @transform_3(%arg0: i32, %arg1: i32) -> (i32, i32, i32) {
    %c0_i32 = arith.constant 0 : i32
    %c0_i32_0 = arith.constant 0 : i32
    return %arg0, %c0_i32, %arg1 : i32, i32, i32
  }
}

</mosaic_0001>

<llo_original>
// kernel: super_pixels_forward.1
$region0: #{super_pixels_forward.1}
  #allocation0 [shape = 'u32[]', space=smem, size = 0x4, offset = 0x4, fixed_abs, tag = 'smem constant byte address 0x4 - core index']
  #allocation1 [shape = 'u32[144,128]{1,0:T(1,128)}', space=vmem, size = 0x12000, scoped, tag = 'internal scratch']
  #allocation2 [shape = 'f32[1,1]{1,0:T(1,128)S(6)}', space=smem, size = 0x200, scoped, tag = 'scoped memory for super_pixels_forward.1']
  %s0 = inlined_call_operand.vmem [shape: f32[2,16,256], index: 0, kind: input, shape index: {}]
  %s1 = inlined_call_operand.vmem [shape: f32[16,1], index: 1, kind: input, shape index: {}]
  %s2 = inlined_call_operand.<no memory space> [shape: f32[1,1], index: 2, kind: input, shape index: {}]
  %s3 = inlined_call_operand.vmem [shape: f32[2,1,256], index: 3, kind: output, shape index: {}]
  %s4 = sld [smem:[#allocation0]]
  $region45: #{super_pixels_forward.1} parent=0
    _
  %s6 = ssub.s32 1, %s4
  %s7 = scalar_select 0, %s6, %s4
  %8 = sst [smem:[#allocation2]] %s2
  loop: start=0, step=1, limit=4
  $region2: #{super_pixels_forward.1} parent=0 // loop_pre_header
    _
  $region3: #{super_pixels_forward.1} parent=0 // loop_header
    %s10 = sphi 0, %s14
    %p11 = scmp.ge.s32.totalorder %s10, 4
    %s17 = sphi 0, %s29
    %s18 = sphi 0, %s25
    %s19 = sphi 0, %s17
    %s20 = sphi 0, %s18
    %s21 = sphi 0, %s19
    %s22 = sphi 0, %s20
    %s34 = sphi 0, %s36
    %s37 = sphi 0, %s34
    %s38 = sphi 0, %s37
    %s54 = sphi 0, %s38
    %s58 = sphi 0, %s58
    %s60 = sphi 0, %s58
    %s61 = sphi 0, %s60
    %s75 = sphi 0, %s61
    %s79 = sphi 0, %s79
    %s81 = sphi 0, %s79
    %s82 = sphi 0, %s81
    %s96 = sphi 0, %s82
    %s104 = sphi 0, %s106
    %s107 = sphi 0, %s104
    %s108 = sphi 0, %s107
    %s124 = sphi 0, %s108
  $region4: #{super_pixels_forward.1} parent=0 // loop_header_branch
    %13 = sbr.rel (%p11) target = $region8
  $region5: #{super_pixels_forward.1} parent=0 // loop_body
    %s15 = ssub.s32 %s10, 1
    %s16 = ssub.s32 %s10, 2
    %s23 = sadd.s32 1, %s18
    %p24 = scmp.ge.s32.totalorder %s23, 1
    %s25 = scalar_select %p24, 0, %s23
    %s26 = sadd.s32 1, %s17
    %s27 = scalar_select %p24, %s26, %s17
    %p28 = scmp.ge.s32.totalorder %s27, 2
    %s29 = scalar_select %p28, 0, %s27
    %s30 = ssub.s32 %s17, %s29
    %s31 = ssub.s32 %s18, %s25
    %s32 = sor.u32 %s30, %s31
    %p33 = scmp.eq.s32.totalorder %s32, 0
    %s35 = sadd.s32 %s34, 1
    %s36 = scalar_select %p33, %s34, %s35
    %p39 = pneg %p33
    %p40 = scmp.eq.s32.totalorder %s10, 1
    %p41 = por %p39, %p40
    %p42 = scmp.ne.s32.totalorder %s34, %s37
    %p43 = scmp.eq.s32.totalorder %s10, 0
    %p44 = por %p42, %p43
    %p45 = scmp.ne.s32.totalorder %s34, %s37
    %p46 = scmp.eq.s32.totalorder %s15, 1
    %p47 = por %p45, %p46
    %p48 = scmp.ne.s32.totalorder %s37, %s38
    %p49 = scmp.eq.s32.totalorder %s15, 0
    %p50 = por %p48, %p49
    %p51 = scmp.ne.s32.totalorder %s37, %s38
    %p52 = scmp.eq.s32.totalorder %s16, 1
    %p53 = por %p51, %p52
    %p55 = scmp.ne.s32.totalorder %s38, %s54
    %p56 = scmp.eq.s32.totalorder %s16, 0
    %p57 = por %p55, %p56
    %s59 = sadd.s32 %s58, 1
    %p62 = scmp.eq.s32.totalorder %s10, 1
    %p63 = scmp.ne.s32.totalorder %s58, %s60
    %p64 = scmp.eq.s32.totalorder %s10, 0
    %p65 = por %p63, %p64
    %p66 = scmp.ne.s32.totalorder %s58, %s60
    %p67 = scmp.eq.s32.totalorder %s15, 1
    %p68 = por %p66, %p67
    %p69 = scmp.ne.s32.totalorder %s60, %s61
    %p70 = scmp.eq.s32.totalorder %s15, 0
    %p71 = por %p69, %p70
    %p72 = scmp.ne.s32.totalorder %s60, %s61
    %p73 = scmp.eq.s32.totalorder %s16, 1
    %p74 = por %p72, %p73
    %p76 = scmp.ne.s32.totalorder %s61, %s75
    %p77 = scmp.eq.s32.totalorder %s16, 0
    %p78 = por %p76, %p77
    %s80 = sadd.s32 %s79, 1
    %p83 = scmp.eq.s32.totalorder %s10, 1
    %p84 = scmp.ne.s32.totalorder %s79, %s81
    %p85 = scmp.eq.s32.totalorder %s10, 0
    %p86 = por %p84, %p85
    %p87 = scmp.ne.s32.totalorder %s79, %s81
    %p88 = scmp.eq.s32.totalorder %s15, 1
    %p89 = por %p87, %p88
    %p90 = scmp.ne.s32.totalorder %s81, %s82
    %p91 = scmp.eq.s32.totalorder %s15, 0
    %p92 = por %p90, %p91
    %p93 = scmp.ne.s32.totalorder %s81, %s82
    %p94 = scmp.eq.s32.totalorder %s16, 1
    %p95 = por %p93, %p94
    %p97 = scmp.ne.s32.totalorder %s82, %s96
    %p98 = scmp.eq.s32.totalorder %s16, 0
    %p99 = por %p97, %p98
    %s100 = ssub.s32 %s17, %s29
    %s101 = ssub.s32 %s18, %s25
    %s102 = sor.u32 %s100, %s101
    %p103 = scmp.eq.s32.totalorder %s102, 0
    %s105 = sadd.s32 %s104, 1
    %s106 = scalar_select %p103, %s104, %s105
    %p109 = pneg %p103
    %p110 = scmp.eq.s32.totalorder %s10, 1
    %p111 = por %p109, %p110
    %p112 = scmp.ne.s32.totalorder %s104, %s107
    %p113 = scmp.eq.s32.totalorder %s10, 0
    %p114 = por %p112, %p113
    %p115 = scmp.ne.s32.totalorder %s104, %s107
    %p116 = scmp.eq.s32.totalorder %s15, 1
    %p117 = por %p115, %p116
    %p118 = scmp.ne.s32.totalorder %s107, %s108
    %p119 = scmp.eq.s32.totalorder %s15, 0
    %p120 = por %p118, %p119
    %p121 = scmp.ne.s32.totalorder %s107, %s108
    %p122 = scmp.eq.s32.totalorder %s16, 1
    %p123 = por %p121, %p122
    %p125 = scmp.ne.s32.totalorder %s108, %s124
    %p126 = scmp.eq.s32.totalorder %s16, 0
    %p127 = por %p125, %p126
    %p128 = scmp.le.s32.totalorder 1, %s10
    %p129 = scmp.lt.s32.totalorder %s10, 3
    %p130 = pnand %p128, %p129
    %p131 = pneg %p130
    // Predicated region
    $region9: #{super_pixels_forward.1} parent=5 // pred_check
      _
    $region10: #{super_pixels_forward.1} parent=5 // pred_check_branch
      %133 = sbr.rel (%p130) target = $region12
    $region11: #{super_pixels_forward.1} parent=5 // pred_region
      %s134 = ssub.s32 %s10, 1
      // Predicated region
      $region13: #{super_pixels_forward.1} parent=11 // pred_check
        %p135 = pneg %p71
      $region14: #{super_pixels_forward.1} parent=11 // pred_check_branch
        %137 = sbr.rel (%p135) target = $region16
      $region15: #{super_pixels_forward.1} parent=11 // pred_region
        _
      $region16: #{super_pixels_forward.1} parent=11 // pred_fallthru
        _
      // Predicated region
      $region17: #{super_pixels_forward.1} parent=11 // pred_check
        %p138 = pneg %p92
      $region18: #{super_pixels_forward.1} parent=11 // pred_check_branch
        %140 = sbr.rel (%p138) target = $region20
      $region19: #{super_pixels_forward.1} parent=11 // pred_region
        _
      $region20: #{super_pixels_forward.1} parent=11 // pred_fallthru
        _
    $region12: #{super_pixels_forward.1} parent=5 // pred_fallthru
      _
    %p141 = scmp.lt.s32.totalorder %s10, 2
    // Predicated region
    $region21: #{super_pixels_forward.1} parent=5 // pred_check
      %p142 = pneg %p141
    $region22: #{super_pixels_forward.1} parent=5 // pred_check_branch
      %144 = sbr.rel (%p142) target = $region24
    $region23: #{super_pixels_forward.1} parent=5 // pred_region
      // Predicated region
      $region25: #{super_pixels_forward.1} parent=23 // pred_check
        %p145 = pneg %p44
      $region26: #{super_pixels_forward.1} parent=23 // pred_check_branch
        %147 = sbr.rel (%p145) target = $region28
      $region27: #{super_pixels_forward.1} parent=23 // pred_region
        %s148 = smul.u32 2, %s18
        %p149 = scmp.lt.s32.totalorder %s17, 1
        %s150 = scalar_select %p149, %s17, 1
        %p151 = scmp.lt.s32.totalorder %s148, 1
        %s152 = scalar_select %p151, %s148, 1
        %s153 = smul.addr %s150, 4
        %s154 = sadd.s32 %s152, %s153
        %s155 = smul.addr %s154, 8
        %s156 = scalar_lea.vmem %s0, %s155
        %s157 = smul.u32 2, %s18
      $region28: #{super_pixels_forward.1} parent=23 // pred_fallthru
        _
    $region24: #{super_pixels_forward.1} parent=5 // pred_fallthru
      _
    %p158 = scmp.le.s32.totalorder 1, %s10
    %p159 = scmp.lt.s32.totalorder %s10, 3
    %p160 = pnand %p158, %p159
    %p161 = pneg %p160
    // Predicated region
    $region29: #{super_pixels_forward.1} parent=5 // pred_check
      _
    $region30: #{super_pixels_forward.1} parent=5 // pred_check_branch
      %163 = sbr.rel (%p160) target = $region32
    $region31: #{super_pixels_forward.1} parent=5 // pred_region
      %s164 = ssub.s32 %s10, 1
      %s165 = smul.u32 2, %s20
      %p166 = scmp.lt.s32.totalorder %s19, 1
      %s167 = scalar_select %p166, %s19, 1
      %p168 = scmp.lt.s32.totalorder %s165, 1
      %s169 = scalar_select %p168, %s165, 1
      %s170 = smul.addr %s167, 4
      %s171 = sadd.s32 %s169, %s170
      %s172 = smul.addr %s171, 8
      %s173 = scalar_lea.vmem %s0, %s172
      %p174 = pneg %p50
      %p175 = pneg %p47
      %p176 = pneg %p71
      %p177 = pneg %p68
      %p178 = pneg %p92
      %p179 = pneg %p89
      %p180 = pneg %p120
      %p181 = pneg %p117
      %s182 = smul.u32 2, %s20
      %p183 = scmp.lt.s32.totalorder %s19, 1
      %s184 = scalar_select %p183, %s19, 1
      %p185 = scmp.lt.s32.totalorder %s182, 1
      %s186 = scalar_select %p185, %s182, 1
      %s187 = smul.addr %s184, 2
      %s188 = sadd.s32 %s186, %s187
      %s189 = scalar_lea.vmem %s3, %s188
      %s190 = smul.u32 2, %s20
      %p191 = scmp.lt.s32.totalorder %s19, 1
      %s192 = scalar_select %p191, %s19, 1
      %p193 = scmp.lt.s32.totalorder %s190, 1
      %s194 = scalar_select %p193, %s190, 1
      %s195 = smul.addr %s192, 4
      %s196 = sadd.s32 %s194, %s195
      %s197 = smul.addr %s196, 8
      %s198 = scalar_lea.vmem %s0, %s197
      %s199 = smul.u32 2, %s20
      %s200 = smul.u32 2, %s20
      %p201 = scmp.lt.s32.totalorder %s19, 1
      %s202 = scalar_select %p201, %s19, 1
      %p203 = scmp.lt.s32.totalorder %s200, 1
      %s204 = scalar_select %p203, %s200, 1
      %s205 = smul.addr %s202, 2
      %s206 = sadd.s32 %s204, %s205
      %s207 = scalar_lea.vmem %s3, %s206
      %s208 = smul.u32 2, %s20
      %v209 = vld [vmem:[%s198] sm:$0xff]
      %v210 = vld [vmem:[%s198 + $0x8] sm:$0xff]
      %v211 = vld [vmem:[%s198 + $0x10] sm:$0xff]
      %v212 = vld [vmem:[%s198 + $0x18] sm:$0xff]
      %v213 = vld [vmem:[%s1] sm:$0xff]
      %v214 = vld [vmem:[%s1 + $0x8] sm:$0xff]
      %216 = vset.pattern.permute.xlu0 0
      %217 = vperm.xlu0 %216, %v213
      %v218 = vpop.permute.xlu0 %217
      %221 = vset.pattern.permute.xlu0 0
      %222 = vperm.xlu0 %221, %v214
      %v223 = vpop.permute.xlu0 %222
      %v225 = vmul.f32 %v209, %v218
      %v226 = vmul.f32 %v210, %v218
      %v227 = vmul.f32 %v211, %v223
      %v228 = vmul.f32 %v212, %v223
      %v229 = vadd.f32 %v225, %v227
      %v230 = vrot.slane %v229, 4
      %v231 = vadd.f32 %v229, %v230
      %v232 = vrot.slane %v231, 2
      %v233 = vadd.f32 %v231, %v232
      %v234 = vrot.slane %v233, 1
      %v235 = vadd.f32 %v233, %v234
      %v236 = vadd.f32 %v226, %v228
      %v237 = vrot.slane %v236, 4
      %v238 = vadd.f32 %v236, %v237
      %v239 = vrot.slane %v238, 2
      %v240 = vadd.f32 %v238, %v239
      %v241 = vrot.slane %v240, 1
      %v242 = vadd.f32 %v240, %v241
      %s243 = sld [smem:[#allocation2]]
      %v244 = vstv %s243
      %v245 = vadd.f32 %v235, %v244
      %v246 = vadd.f32 %v242, %v244
      %v249 = vcombine.low %v245, %v246
      %v251 = vunpack.c.l.s4 1966171168
      %v252 = vunpack.c.0.s8 %v251
      %v253 = vlaneseq
      %v254 = vshrl.u32 %v253, 7
      %v255 = vsub.s32 %v252, %v254
      %v256 = vrot.slane %v249, %v255
      %v258 = vunpack.c.l.s4 1966171168
      %v259 = vunpack.c.0.s8 %v258
      %v260 = vlaneseq
      %v261 = vshrl.u32 %v260, 7
      %v262 = vsub.s32 %v259, %v261
      %v263 = vrot.slane %v256, %v262
      %v265 = vlaneseq
      %vm266 = vcmp.ge.s32.totalorder %v265, 0
      %vm267 = vcmp.lt.s32.totalorder %v265, 256
      %vm268 = vmand %vm266, %vm267
      %269 = vst.msk [vmem:[%s207] sm:$0x3] %vm268, %v263
      %s270 = smul.u32 2, %s20
      %p271 = scmp.lt.s32.totalorder %s19, 1
      %s272 = scalar_select %p271, %s19, 1
      %p273 = scmp.lt.s32.totalorder %s270, 1
      %s274 = scalar_select %p273, %s270, 1
      %s275 = smul.addr %s272, 2
      %s276 = sadd.s32 %s274, %s275
      %s277 = scalar_lea.vmem %s3, %s276
      // Predicated region
      $region33: #{super_pixels_forward.1} parent=31 // pred_check
        %p278 = pneg %p117
      $region34: #{super_pixels_forward.1} parent=31 // pred_check_branch
        %280 = sbr.rel (%p278) target = $region36
      $region35: #{super_pixels_forward.1} parent=31 // pred_region
        %s281 = smul.u32 2, %s20
      $region36: #{super_pixels_forward.1} parent=31 // pred_fallthru
        _
    $region32: #{super_pixels_forward.1} parent=5 // pred_fallthru
      _
    %p282 = scmp.le.s32.totalorder 2, %s10
    // Predicated region
    $region37: #{super_pixels_forward.1} parent=5 // pred_check
      %p283 = pneg %p282
    $region38: #{super_pixels_forward.1} parent=5 // pred_check_branch
      %285 = sbr.rel (%p283) target = $region40
    $region39: #{super_pixels_forward.1} parent=5 // pred_region
      %s286 = ssub.s32 %s10, 2
      // Predicated region
      $region41: #{super_pixels_forward.1} parent=39 // pred_check
        %p287 = pneg %p123
      $region42: #{super_pixels_forward.1} parent=39 // pred_check_branch
        %289 = sbr.rel (%p287) target = $region44
      $region43: #{super_pixels_forward.1} parent=39 // pred_region
        %s290 = smul.u32 2, %s22
        %p291 = scmp.lt.s32.totalorder %s21, 1
        %s292 = scalar_select %p291, %s21, 1
        %p293 = scmp.lt.s32.totalorder %s290, 1
        %s294 = scalar_select %p293, %s290, 1
        %s295 = smul.addr %s292, 2
        %s296 = sadd.s32 %s294, %s295
        %s297 = scalar_lea.vmem %s3, %s296
      $region44: #{super_pixels_forward.1} parent=39 // pred_fallthru
        _
    $region40: #{super_pixels_forward.1} parent=5 // pred_fallthru
      _
  $region6: #{super_pixels_forward.1} parent=0 // loop_footer
    %s14 = sadd.s32 1, %s10
  $region7: #{super_pixels_forward.1} parent=0 // loop_footer_branch
    %9 = sbr.rel target = $region3
  $region8: #{super_pixels_forward.1} parent=0 // loop_exit
    _

</llo_original>
